<compile_context>
chip_gen: v6e
topology: v6e:2x2x1
jax: 0.10.0
libtpu: 0.0.40
codegen_flags: <defaults>
</compile_context>

<pallas_src>
import jax
import jax.numpy as jnp
import numpy as np
from jax.experimental import pallas as pl
from jax.experimental.pallas import tpu as pltpu

BN_EPS = 1e-5
PP_COLS = 16  # packed per-channel param columns


# --------------------------------- kernel ----------------------------------
def _cgru_rwa_kernel(x_ref, h_ref, wix_ref, wih_ref, wga_ref, pp_ref, mask_ref,
                     out_ref):
    Fb, BW = out_ref.shape

    # packed per-channel params for this channel block: (Fb, 16) f32
    pp = pp_ref[...]
    bi, bg, gamma_g, beta_g = pp[:, 0:1], pp[:, 1:2], pp[:, 2:3], pp[:, 3:4]
    ba, gamma_a, beta_a, bga = pp[:, 4:5], pp[:, 5:6], pp[:, 6:7], pp[:, 7:8]
    wg = pp[:, 8:11]    # (Fb, 3) depthwise 1x3 taps
    wa = pp[:, 11:16]   # (Fb, 5) depthwise 1x5 taps

    # 1x1 conv over cat([x, h]) for this channel block: two bf16 MXU matmuls,
    # f32 accumulate (no wrapper-side concat / cast needed).
    x_bf = x_ref[...].astype(jnp.bfloat16)
    h_bf = h_ref[...].astype(jnp.bfloat16)
    i_t = (jnp.dot(wix_ref[...], x_bf, preferred_element_type=jnp.float32)
           + jnp.dot(wih_ref[...], h_bf, preferred_element_type=jnp.float32)
           + bi)                                                # (Fb, BW) f32

    # Depthwise 1x3 / 1x5 convs as per-shift FMA accumulation.  Each shifted
    # copy shifted_s[c, b*W+w] = i_t[c, b*W+(w+s)] (zero outside [0, W)) is
    # built with pltpu.roll (XLU) * a precomputed batch-boundary lane mask,
    # immediately accumulated into both g_acc and a_acc, then dropped.
    g_acc = wg[:, 1:2] * i_t + bg            # center taps
    a_acc = wa[:, 2:3] * i_t + ba

    # (shift s, mask row, 1x3 tap index or None, 1x5 tap index)
    taps = ((-2, 0, None, 0), (-1, 1, 0, 1), (1, 2, 2, 3), (2, 3, None, 4))
    for s, mrow, gi, ai in taps:
        rolled = pltpu.roll(i_t, shift=(-s) % BW, axis=1)       # roll[j]=i_t[j+s]
        contrib = rolled * mask_ref[mrow:mrow + 1, :]
        if gi is not None:
            g_acc = g_acc + wg[:, gi:gi + 1] * contrib
        a_acc = a_acc + wa[:, ai:ai + 1] * contrib

    inv_n = 1.0 / BW

    def bn(v, gamma, beta):
        # one-pass training-mode BatchNorm2d: biased stats over (B, W) per channel
        s1 = jnp.sum(v, axis=1, keepdims=True)
        s2 = jnp.sum(v * v, axis=1, keepdims=True)
        mean = s1 * inv_n
        var = jnp.maximum(s2 * inv_n - mean * mean, 0.0)
        return gamma * (v - mean) * jax.lax.rsqrt(var + BN_EPS) + beta

    # sigmoid: exp + approximate reciprocal both ride the EUP slot
    g_t = pl.reciprocal(1.0 + jnp.exp(-bn(g_acc, gamma_g, beta_g)), approx=True)
    a_t = bn(a_acc, gamma_a, beta_a)

    # grouped 1x1 conv (groups = num_classes): this channel block holds whole
    # groups, so it is a block-diagonal (Fb, Fb) bf16 matmul.
    ga = jnp.dot(wga_ref[...], (i_t * a_t).astype(jnp.bfloat16),
                 preferred_element_type=jnp.float32) + bga

    out_ref[...] = g_t * i_t + (1.0 - g_t) * jnp.tanh(ga)


# -------------------------------- wrapper ----------------------------------
def cgru_rwa_cell(x_fold, h_fold, kp):
    """One cell step in the folded layout.

    x_fold: (T, B*W) f32, h_fold: (F, B*W) f32  ->  new h: (F, B*W) f32.
    No relayout around the kernel; recurrent stepping stays in this layout.
    """
    T, BW = x_fold.shape
    F = h_fold.shape[0]
    NB = kp["wga_blocks"].shape[0]          # channel blocks (2 -> both v7x cores)
    Fb = F // NB

    return pl.pallas_call(
        _cgru_rwa_kernel,
        grid=(NB,),
        out_shape=jax.ShapeDtypeStruct((F, BW), jnp.float32),
        in_specs=[
            pl.BlockSpec((T, BW), lambda i: (0, 0)),          # x (shared)
            pl.BlockSpec((F, BW), lambda i: (0, 0)),          # h (shared)
            pl.BlockSpec((Fb, T), lambda i: (i, 0)),          # Wi_x block
            pl.BlockSpec((Fb, F), lambda i: (i, 0)),          # Wi_h block
            pl.BlockSpec((None, Fb, Fb), lambda i: (i, 0, 0)),  # grouped 1x1 block
            pl.BlockSpec((Fb, PP_COLS), lambda i: (i, 0)),    # packed params block
            pl.BlockSpec((4, BW), lambda i: (0, 0)),          # shift lane masks
        ],
        out_specs=pl.BlockSpec((Fb, BW), lambda i: (i, 0)),
        compiler_params=pltpu.CompilerParams(
            dimension_semantics=("parallel",)),
    )(x_fold, h_fold, kp["wix"], kp["wih"], kp["wga_blocks"], kp["pp"],
      kp["masks"])


# ---------------------- layout helpers (demo boundary) ----------------------
def fold_nchw(v):
    """(B, C, 1, W) -> (C, B*W)."""
    B, C, _, W = v.shape
    return jnp.transpose(v[:, :, 0, :], (1, 0, 2)).reshape(C, B * W)


def unfold_to_nchw(v, batch):
    """(C, B*W) -> (B, C, 1, W)."""
    C, BW = v.shape
    W = BW // batch
    return jnp.transpose(v.reshape(C, batch, W), (1, 0, 2))[:, :, None, :]


# ------------------------ parameters (deterministic) ------------------------
def init_params(key, T, F, G, B, W, num_channel_blocks=2):
    ks = jax.random.split(key, 12)
    wi = 0.1 * jax.random.normal(ks[0], (F, T + F, 1, 1), jnp.float32)
    bi = 0.1 * jax.random.normal(ks[1], (F,), jnp.float32)
    wg = 0.3 * jax.random.normal(ks[2], (F, 1, 1, 3), jnp.float32)
    bg = 0.1 * jax.random.normal(ks[3], (F,), jnp.float32)
    wa = 0.3 * jax.random.normal(ks[4], (F, 1, 1, 5), jnp.float32)
    ba = 0.1 * jax.random.normal(ks[5], (F,), jnp.float32)
    wga = 0.1 * jax.random.normal(ks[6], (F, F // G, 1, 1), jnp.float32)
    bga = 0.1 * jax.random.normal(ks[7], (F,), jnp.float32)
    gamma_g = 1.0 + 0.1 * jax.random.normal(ks[8], (F,), jnp.float32)
    beta_g = 0.1 * jax.random.normal(ks[9], (F,), jnp.float32)
    gamma_a = 1.0 + 0.1 * jax.random.normal(ks[10], (F,), jnp.float32)
    beta_a = 0.1 * jax.random.normal(ks[11], (F,), jnp.float32)

    torch_params = dict(wi=wi, bi=bi, wg=wg, bg=bg, wa=wa, ba=ba, wga=wga,
                        bga=bga, gamma_g=gamma_g, beta_g=beta_g,
                        gamma_a=gamma_a, beta_a=beta_a)

    # --- kernel-friendly forms -------------------------------------------
    NB = num_channel_blocks
    Fb = F // NB
    Fg = F // G
    assert F % NB == 0 and Fb % Fg == 0, "channel blocks must contain whole groups"

    # split 1x1 weight over cat([x, h]) channels into Wx / Wh, bf16 for the MXU
    wix = wi[:, :T, 0, 0].astype(jnp.bfloat16)                       # (F, T)
    wih = wi[:, T:, 0, 0].astype(jnp.bfloat16)                       # (F, F)

    # grouped 1x1 weight -> block-diagonal, stored per channel block
    wga2 = wga[:, :, 0, 0]
    wga_full = jnp.zeros((F, F), jnp.float32)
    for g in range(G):
        wga_full = wga_full.at[g * Fg:(g + 1) * Fg, g * Fg:(g + 1) * Fg].set(
            wga2[g * Fg:(g + 1) * Fg, :])
    wga_blocks = jnp.stack(
        [wga_full[i * Fb:(i + 1) * Fb, i * Fb:(i + 1) * Fb] for i in range(NB)]
    ).astype(jnp.bfloat16)                                           # (NB, Fb, Fb)

    # packed per-channel params (F, 16):
    # [bi, bg, gamma_g, beta_g, ba, gamma_a, beta_a, bga, wg(3), wa(5)]
    col = lambda v: v.reshape(F, 1)
    pp = jnp.concatenate(
        [col(bi), col(bg), col(gamma_g), col(beta_g),
         col(ba), col(gamma_a), col(beta_a), col(bga),
         wg[:, 0, 0, :], wa[:, 0, 0, :]], axis=1).astype(jnp.float32)  # (F, 16)

    # precomputed batch-boundary lane masks for shifts [-2, -1, +1, +2]
    wpos = np.arange(B * W) % W
    masks = jnp.asarray(np.stack([wpos >= 2, wpos >= 1,
                                  wpos <= W - 2, wpos <= W - 3]
                                 ).astype(np.float32))                # (4, B*W)

    kernel_params = dict(wix=wix, wih=wih, wga_blocks=wga_blocks, pp=pp,
                         masks=masks)
    return torch_params, kernel_params


# ----------------------- pure-JAX (NCHW) reference --------------------------
def reference_forward(x, h, p, F, G):
    dn = ("NCHW", "OIHW", "NCHW")

    def conv(inp, w, b, wpad, groups):
        out = jax.lax.conv_general_dilated(
            inp, w, window_strides=(1, 1), padding=[(0, 0), wpad],
            dimension_numbers=dn, feature_group_count=groups)
        return out + b.reshape(1, -1, 1, 1)

    def bn(v, gamma, beta):
        mean = v.mean(axis=(0, 2, 3), keepdims=True)
        var = ((v - mean) ** 2).mean(axis=(0, 2, 3), keepdims=True)
        return (gamma.reshape(1, -1, 1, 1) * (v - mean) / jnp.sqrt(var + BN_EPS)
                + beta.reshape(1, -1, 1, 1))

    xh = jnp.concatenate([x, h], axis=1)
    i_t = conv(xh, p["wi"], p["bi"], (0, 0), 1)
    g_t = jax.nn.sigmoid(bn(conv(i_t, p["wg"], p["bg"], (1, 1), F),
                            p["gamma_g"], p["beta_g"]))
    a_t = bn(conv(i_t, p["wa"], p["ba"], (2, 2), F), p["gamma_a"], p["beta_a"])
    ga = conv(i_t * a_t, p["wga"], p["bga"], (0, 0), G)
    return g_t * i_t + (1.0 - g_t) * jnp.tanh(ga)


if __name__ == "__main__":
    # batch=2, time_steps=8, num_filters=32, num_features=128, num_classes=4
    B, T, F, W, G = 2, 8, 32, 128, 4
    key = jax.random.PRNGKey(0)
    kx, kh, kp = jax.random.split(key, 3)

    x = jax.random.normal(kx, (B, T, 1, W), jnp.float32)        # NCHW, H == 1
    h0 = jax.random.uniform(kh, (B, F, 1, W), jnp.float32)      # init_hidden(): uniform_()
    torch_params, kernel_params = init_params(kp, T, F, G, B, W)

    # fold once at the boundary; recurrent stepping would stay in folded layout
    x_fold = fold_nchw(x)
    h_fold = fold_nchw(h0)
    h_new_fold = jax.block_until_ready(cgru_rwa_cell(x_fold, h_fold, kernel_params))
    h_new = unfold_to_nchw(h_new_fold, B)

    ref = jax.block_until_ready(reference_forward(x, h0, torch_params, F, G))
    np.testing.assert_allclose(np.asarray(h_new), np.asarray(ref),
                               atol=2e-2, rtol=2e-2)
    # TODO(synk): BatchNorm2d running-mean/var buffer updates (training-mode
    # side effect) are not emitted; only the forward output is produced.
    print("KERNEL_OK")
</pallas_src>

<mosaic_0001>
module attributes {stable_mosaic.version = 11 : i64} {
  func.func @_cgru_rwa_kernel(%arg0: i32, %arg1: memref<8x256xf32, #tpu.memory_space<vmem>>, %arg2: memref<32x256xf32, #tpu.memory_space<vmem>>, %arg3: memref<16x8xbf16, #tpu.memory_space<vmem>>, %arg4: memref<16x32xbf16, #tpu.memory_space<vmem>>, %arg5: memref<1x16x16xbf16, #tpu.memory_space<vmem>>, %arg6: memref<16x16xf32, #tpu.memory_space<vmem>>, %arg7: memref<4x256xf32, #tpu.memory_space<vmem>>, %arg8: memref<16x256xf32, #tpu.memory_space<vmem>>) attributes {dimension_semantics = [#tpu.dimension_semantics<parallel>], iteration_bounds = array<i64: 2>, scalar_prefetch = 0 : i64, scratch_operands = 0 : i64, tpu.core_type = #tpu.core_type<tc>, window_params = [{pipeline_mode = #tpu.pipeline_mode<synchronous>, transform_indices = @transform_0, window_bounds = array<i64: 8, 256>}, {pipeline_mode = #tpu.pipeline_mode<synchronous>, transform_indices = @transform_1, window_bounds = array<i64: 32, 256>}, {transform_indices = @transform_2, window_bounds = array<i64: 16, 8>}, {transform_indices = @transform_3, window_bounds = array<i64: 16, 32>}, {transform_indices = @transform_4, window_bounds = array<i64: 1, 16, 16>}, {transform_indices = @transform_5, window_bounds = array<i64: 16, 16>}, {pipeline_mode = #tpu.pipeline_mode<synchronous>, transform_indices = @transform_6, window_bounds = array<i64: 4, 256>}, {transform_indices = @transform_7, window_bounds = array<i64: 16, 256>}]} {
    %c0 = arith.constant 0 : index
    %c0_0 = arith.constant 0 : index
    %0 = vector.load %arg6[%c0, %c0_0] : memref<16x16xf32, #tpu.memory_space<vmem>>, vector<16x16xf32>
    %1 = vector.extract_strided_slice %0 {offsets = [0, 0], sizes = [16, 1], strides = [1, 1]} : vector<16x16xf32> to vector<16x1xf32>
    %2 = vector.extract_strided_slice %0 {offsets = [0, 1], sizes = [16, 1], strides = [1, 1]} : vector<16x16xf32> to vector<16x1xf32>
    %3 = vector.extract_strided_slice %0 {offsets = [0, 2], sizes = [16, 1], strides = [1, 1]} : vector<16x16xf32> to vector<16x1xf32>
    %4 = vector.extract_strided_slice %0 {offsets = [0, 3], sizes = [16, 1], strides = [1, 1]} : vector<16x16xf32> to vector<16x1xf32>
    %5 = vector.extract_strided_slice %0 {offsets = [0, 4], sizes = [16, 1], strides = [1, 1]} : vector<16x16xf32> to vector<16x1xf32>
    %6 = vector.extract_strided_slice %0 {offsets = [0, 5], sizes = [16, 1], strides = [1, 1]} : vector<16x16xf32> to vector<16x1xf32>
    %7 = vector.extract_strided_slice %0 {offsets = [0, 6], sizes = [16, 1], strides = [1, 1]} : vector<16x16xf32> to vector<16x1xf32>
    %8 = vector.extract_strided_slice %0 {offsets = [0, 7], sizes = [16, 1], strides = [1, 1]} : vector<16x16xf32> to vector<16x1xf32>
    %9 = vector.extract_strided_slice %0 {offsets = [0, 8], sizes = [16, 3], strides = [1, 1]} : vector<16x16xf32> to vector<16x3xf32>
    %10 = vector.extract_strided_slice %0 {offsets = [0, 11], sizes = [16, 5], strides = [1, 1]} : vector<16x16xf32> to vector<16x5xf32>
    %c0_1 = arith.constant 0 : index
    %c0_2 = arith.constant 0 : index
    %11 = vector.load %arg1[%c0_1, %c0_2] : memref<8x256xf32, #tpu.memory_space<vmem>>, vector<8x256xf32>
    %12 = arith.truncf %11 : vector<8x256xf32> to vector<8x256xbf16>
    %c0_3 = arith.constant 0 : index
    %c0_4 = arith.constant 0 : index
    %13 = vector.load %arg2[%c0_3, %c0_4] : memref<32x256xf32, #tpu.memory_space<vmem>>, vector<32x256xf32>
    %14 = arith.truncf %13 : vector<32x256xf32> to vector<32x256xbf16>
    %c0_5 = arith.constant 0 : index
    %c0_6 = arith.constant 0 : index
    %15 = vector.load %arg3[%c0_5, %c0_6] : memref<16x8xbf16, #tpu.memory_space<vmem>>, vector<16x8xbf16>
    %cst = arith.constant dense<0.000000e+00> : vector<16x256xf32>
    %16 = tpu.matmul %15, %12, %cst {dimension_numbers = #tpu.dot_dimension_numbers<[1], [0], [0], [1], [0, 0, 1, 1], [], []>} : vector<16x8xbf16>, vector<8x256xbf16>, vector<16x256xf32> -> vector<16x256xf32>
    %c0_7 = arith.constant 0 : index
    %c0_8 = arith.constant 0 : index
    %17 = vector.load %arg4[%c0_7, %c0_8] : memref<16x32xbf16, #tpu.memory_space<vmem>>, vector<16x32xbf16>
    %cst_9 = arith.constant dense<0.000000e+00> : vector<16x256xf32>
    %18 = tpu.matmul %17, %14, %cst_9 {dimension_numbers = #tpu.dot_dimension_numbers<[1], [0], [0], [1], [0, 0, 1, 1], [], []>} : vector<16x32xbf16>, vector<32x256xbf16>, vector<16x256xf32> -> vector<16x256xf32>
    %19 = arith.addf %16, %18 : vector<16x256xf32>
    %20 = vector.broadcast %1 : vector<16x1xf32> to vector<16x256xf32>
    %21 = arith.addf %19, %20 : vector<16x256xf32>
    %22 = vector.extract_strided_slice %9 {offsets = [0, 1], sizes = [16, 1], strides = [1, 1]} : vector<16x3xf32> to vector<16x1xf32>
    %23 = vector.broadcast %22 : vector<16x1xf32> to vector<16x256xf32>
    %24 = arith.mulf %23, %21 : vector<16x256xf32>
    %25 = vector.broadcast %2 : vector<16x1xf32> to vector<16x256xf32>
    %26 = arith.addf %24, %25 : vector<16x256xf32>
    %27 = vector.extract_strided_slice %10 {offsets = [0, 2], sizes = [16, 1], strides = [1, 1]} : vector<16x5xf32> to vector<16x1xf32>
    %28 = vector.broadcast %27 : vector<16x1xf32> to vector<16x256xf32>
    %29 = arith.mulf %28, %21 : vector<16x256xf32>
    %30 = vector.broadcast %5 : vector<16x1xf32> to vector<16x256xf32>
    %31 = arith.addf %29, %30 : vector<16x256xf32>
    %c2_i32 = arith.constant 2 : i32
    %32 = tpu.dynamic_rotate %21 by %c2_i32 dim 1 : vector<16x256xf32>, i32 -> vector<16x256xf32>
    %c0_10 = arith.constant 0 : index
    %c0_11 = arith.constant 0 : index
    %33 = vector.load %arg7[%c0_10, %c0_11] : memref<4x256xf32, #tpu.memory_space<vmem>>, vector<1x256xf32>
    %34 = vector.broadcast %33 : vector<1x256xf32> to vector<16x256xf32>
    %35 = arith.mulf %32, %34 : vector<16x256xf32>
    %36 = vector.extract_strided_slice %10 {offsets = [0, 0], sizes = [16, 1], strides = [1, 1]} : vector<16x5xf32> to vector<16x1xf32>
    %37 = vector.broadcast %36 : vector<16x1xf32> to vector<16x256xf32>
    %38 = arith.mulf %37, %35 : vector<16x256xf32>
    %39 = arith.addf %31, %38 : vector<16x256xf32>
    %c1_i32 = arith.constant 1 : i32
    %40 = tpu.dynamic_rotate %21 by %c1_i32 dim 1 : vector<16x256xf32>, i32 -> vector<16x256xf32>
    %c1 = arith.constant 1 : index
    %c0_12 = arith.constant 0 : index
    %41 = vector.load %arg7[%c1, %c0_12] : memref<4x256xf32, #tpu.memory_space<vmem>>, vector<1x256xf32>
    %42 = vector.broadcast %41 : vector<1x256xf32> to vector<16x256xf32>
    %43 = arith.mulf %40, %42 : vector<16x256xf32>
    %44 = vector.extract_strided_slice %9 {offsets = [0, 0], sizes = [16, 1], strides = [1, 1]} : vector<16x3xf32> to vector<16x1xf32>
    %45 = vector.broadcast %44 : vector<16x1xf32> to vector<16x256xf32>
    %46 = arith.mulf %45, %43 : vector<16x256xf32>
    %47 = arith.addf %26, %46 : vector<16x256xf32>
    %48 = vector.extract_strided_slice %10 {offsets = [0, 1], sizes = [16, 1], strides = [1, 1]} : vector<16x5xf32> to vector<16x1xf32>
    %49 = vector.broadcast %48 : vector<16x1xf32> to vector<16x256xf32>
    %50 = arith.mulf %49, %43 : vector<16x256xf32>
    %51 = arith.addf %39, %50 : vector<16x256xf32>
    %c255_i32 = arith.constant 255 : i32
    %52 = tpu.dynamic_rotate %21 by %c255_i32 dim 1 : vector<16x256xf32>, i32 -> vector<16x256xf32>
    %c2 = arith.constant 2 : index
    %c0_13 = arith.constant 0 : index
    %53 = vector.load %arg7[%c2, %c0_13] : memref<4x256xf32, #tpu.memory_space<vmem>>, vector<1x256xf32>
    %54 = vector.broadcast %53 : vector<1x256xf32> to vector<16x256xf32>
    %55 = arith.mulf %52, %54 : vector<16x256xf32>
    %56 = vector.extract_strided_slice %9 {offsets = [0, 2], sizes = [16, 1], strides = [1, 1]} : vector<16x3xf32> to vector<16x1xf32>
    %57 = vector.broadcast %56 : vector<16x1xf32> to vector<16x256xf32>
    %58 = arith.mulf %57, %55 : vector<16x256xf32>
    %59 = arith.addf %47, %58 : vector<16x256xf32>
    %60 = vector.extract_strided_slice %10 {offsets = [0, 3], sizes = [16, 1], strides = [1, 1]} : vector<16x5xf32> to vector<16x1xf32>
    %61 = vector.broadcast %60 : vector<16x1xf32> to vector<16x256xf32>
    %62 = arith.mulf %61, %55 : vector<16x256xf32>
    %63 = arith.addf %51, %62 : vector<16x256xf32>
    %c254_i32 = arith.constant 254 : i32
    %64 = tpu.dynamic_rotate %21 by %c254_i32 dim 1 : vector<16x256xf32>, i32 -> vector<16x256xf32>
    %c3 = arith.constant 3 : index
    %c0_14 = arith.constant 0 : index
    %65 = vector.load %arg7[%c3, %c0_14] : memref<4x256xf32, #tpu.memory_space<vmem>>, vector<1x256xf32>
    %66 = vector.broadcast %65 : vector<1x256xf32> to vector<16x256xf32>
    %67 = arith.mulf %64, %66 : vector<16x256xf32>
    %68 = vector.extract_strided_slice %10 {offsets = [0, 4], sizes = [16, 1], strides = [1, 1]} : vector<16x5xf32> to vector<16x1xf32>
    %69 = vector.broadcast %68 : vector<16x1xf32> to vector<16x256xf32>
    %70 = arith.mulf %69, %67 : vector<16x256xf32>
    %71 = arith.addf %63, %70 : vector<16x256xf32>
    %cst_15 = arith.constant dense<0.000000e+00> : vector<16xf32>
    %72 = vector.multi_reduction <add>, %59, %cst_15 [1] : vector<16x256xf32> to vector<16xf32>
    %73 = vector.shape_cast %72 : vector<16xf32> to vector<16x1xf32>
    %74 = arith.mulf %59, %59 : vector<16x256xf32>
    %cst_16 = arith.constant dense<0.000000e+00> : vector<16xf32>
    %75 = vector.multi_reduction <add>, %74, %cst_16 [1] : vector<16x256xf32> to vector<16xf32>
    %76 = vector.shape_cast %75 : vector<16xf32> to vector<16x1xf32>
    %cst_17 = arith.constant 3.906250e-03 : f32
    %77 = vector.broadcast %cst_17 : f32 to vector<16x1xf32>
    %78 = arith.mulf %73, %77 : vector<16x1xf32>
    %cst_18 = arith.constant 3.906250e-03 : f32
    %79 = vector.broadcast %cst_18 : f32 to vector<16x1xf32>
    %80 = arith.mulf %76, %79 : vector<16x1xf32>
    %81 = arith.mulf %78, %78 : vector<16x1xf32>
    %82 = arith.subf %80, %81 : vector<16x1xf32>
    %cst_19 = arith.constant 0.000000e+00 : f32
    %83 = vector.broadcast %cst_19 : f32 to vector<16x1xf32>
    %84 = arith.maximumf %82, %83 : vector<16x1xf32>
    %85 = vector.broadcast %78 : vector<16x1xf32> to vector<16x256xf32>
    %86 = arith.subf %59, %85 : vector<16x256xf32>
    %87 = vector.broadcast %3 : vector<16x1xf32> to vector<16x256xf32>
    %88 = arith.mulf %87, %86 : vector<16x256xf32>
    %cst_20 = arith.constant 9.99999974E-6 : f32
    %89 = vector.broadcast %cst_20 : f32 to vector<16x1xf32>
    %90 = arith.addf %84, %89 : vector<16x1xf32>
    %91 = math.rsqrt %90 : vector<16x1xf32>
    %92 = vector.broadcast %91 : vector<16x1xf32> to vector<16x256xf32>
    %93 = arith.mulf %88, %92 : vector<16x256xf32>
    %94 = vector.broadcast %4 : vector<16x1xf32> to vector<16x256xf32>
    %95 = arith.addf %93, %94 : vector<16x256xf32>
    %cst_21 = arith.constant 0.000000e+00 : f32
    %96 = vector.broadcast %cst_21 : f32 to vector<16x256xf32>
    %97 = arith.subf %96, %95 : vector<16x256xf32>
    %98 = math.exp %97 : vector<16x256xf32>
    %cst_22 = arith.constant 1.000000e+00 : f32
    %99 = vector.broadcast %cst_22 : f32 to vector<16x256xf32>
    %100 = arith.addf %99, %98 : vector<16x256xf32>
    %101 = tpu.reciprocal %100 {approx = true} : vector<16x256xf32> -> vector<16x256xf32>
    %cst_23 = arith.constant dense<0.000000e+00> : vector<16xf32>
    %102 = vector.multi_reduction <add>, %71, %cst_23 [1] : vector<16x256xf32> to vector<16xf32>
    %103 = vector.shape_cast %102 : vector<16xf32> to vector<16x1xf32>
    %104 = arith.mulf %71, %71 : vector<16x256xf32>
    %cst_24 = arith.constant dense<0.000000e+00> : vector<16xf32>
    %105 = vector.multi_reduction <add>, %104, %cst_24 [1] : vector<16x256xf32> to vector<16xf32>
    %106 = vector.shape_cast %105 : vector<16xf32> to vector<16x1xf32>
    %cst_25 = arith.constant 3.906250e-03 : f32
    %107 = vector.broadcast %cst_25 : f32 to vector<16x1xf32>
    %108 = arith.mulf %103, %107 : vector<16x1xf32>
    %cst_26 = arith.constant 3.906250e-03 : f32
    %109 = vector.broadcast %cst_26 : f32 to vector<16x1xf32>
    %110 = arith.mulf %106, %109 : vector<16x1xf32>
    %111 = arith.mulf %108, %108 : vector<16x1xf32>
    %112 = arith.subf %110, %111 : vector<16x1xf32>
    %cst_27 = arith.constant 0.000000e+00 : f32
    %113 = vector.broadcast %cst_27 : f32 to vector<16x1xf32>
    %114 = arith.maximumf %112, %113 : vector<16x1xf32>
    %115 = vector.broadcast %108 : vector<16x1xf32> to vector<16x256xf32>
    %116 = arith.subf %71, %115 : vector<16x256xf32>
    %117 = vector.broadcast %6 : vector<16x1xf32> to vector<16x256xf32>
    %118 = arith.mulf %117, %116 : vector<16x256xf32>
    %cst_28 = arith.constant 9.99999974E-6 : f32
    %119 = vector.broadcast %cst_28 : f32 to vector<16x1xf32>
    %120 = arith.addf %114, %119 : vector<16x1xf32>
    %121 = math.rsqrt %120 : vector<16x1xf32>
    %122 = vector.broadcast %121 : vector<16x1xf32> to vector<16x256xf32>
    %123 = arith.mulf %118, %122 : vector<16x256xf32>
    %124 = vector.broadcast %7 : vector<16x1xf32> to vector<16x256xf32>
    %125 = arith.addf %123, %124 : vector<16x256xf32>
    %c0_29 = arith.constant 0 : index
    %c0_30 = arith.constant 0 : index
    %c0_31 = arith.constant 0 : index
    %126 = vector.load %arg5[%c0_29, %c0_30, %c0_31] : memref<1x16x16xbf16, #tpu.memory_space<vmem>>, vector<1x16x16xbf16>
    %127 = vector.shape_cast %126 : vector<1x16x16xbf16> to vector<16x16xbf16>
    %128 = arith.mulf %21, %125 : vector<16x256xf32>
    %129 = arith.truncf %128 : vector<16x256xf32> to vector<16x256xbf16>
    %cst_32 = arith.constant dense<0.000000e+00> : vector<16x256xf32>
    %130 = tpu.matmul %127, %129, %cst_32 {dimension_numbers = #tpu.dot_dimension_numbers<[1], [0], [0], [1], [0, 0, 1, 1], [], []>} : vector<16x16xbf16>, vector<16x256xbf16>, vector<16x256xf32> -> vector<16x256xf32>
    %131 = vector.broadcast %8 : vector<16x1xf32> to vector<16x256xf32>
    %132 = arith.addf %130, %131 : vector<16x256xf32>
    %133 = arith.mulf %101, %21 : vector<16x256xf32>
    %cst_33 = arith.constant 1.000000e+00 : f32
    %134 = vector.broadcast %cst_33 : f32 to vector<16x256xf32>
    %135 = arith.subf %134, %101 : vector<16x256xf32>
    %136 = math.tanh %132 : vector<16x256xf32>
    %137 = arith.mulf %135, %136 : vector<16x256xf32>
    %138 = arith.addf %133, %137 : vector<16x256xf32>
    %c0_34 = arith.constant 0 : index
    %c0_35 = arith.constant 0 : index
    %139 = vector.load %arg8[%c0_34, %c0_35] : memref<16x256xf32, #tpu.memory_space<vmem>>, vector<16x256xf32>
    tpu.vector_store %arg8[%c0_34, %c0_35], %138 {strides = array<i32>} : memref<16x256xf32, #tpu.memory_space<vmem>>, vector<16x256xf32>,
    return
  }
  func.func @transform_0(%arg0: i32) -> (i32, i32) {
    %c0_i32 = arith.constant 0 : i32
    %c0_i32_0 = arith.constant 0 : i32
    %c0_i32_1 = arith.constant 0 : i32
    return %c0_i32, %c0_i32_0 : i32, i32
  }
  func.func @transform_1(%arg0: i32) -> (i32, i32) {
    %c0_i32 = arith.constant 0 : i32
    %c0_i32_0 = arith.constant 0 : i32
    %c0_i32_1 = arith.constant 0 : i32
    return %c0_i32, %c0_i32_0 : i32, i32
  }
  func.func @transform_2(%arg0: i32) -> (i32, i32) {
    %c0_i32 = arith.constant 0 : i32
    %c0_i32_0 = arith.constant 0 : i32
    return %arg0, %c0_i32 : i32, i32
  }
  func.func @transform_3(%arg0: i32) -> (i32, i32) {
    %c0_i32 = arith.constant 0 : i32
    %c0_i32_0 = arith.constant 0 : i32
    return %arg0, %c0_i32 : i32, i32
  }
  func.func @transform_4(%arg0: i32) -> (i32, i32, i32) {
    %c0_i32 = arith.constant 0 : i32
    %c0_i32_0 = arith.constant 0 : i32
    %c0_i32_1 = arith.constant 0 : i32
    return %arg0, %c0_i32, %c0_i32_0 : i32, i32, i32
  }
  func.func @transform_5(%arg0: i32) -> (i32, i32) {
    %c0_i32 = arith.constant 0 : i32
    %c0_i32_0 = arith.constant 0 : i32
    return %arg0, %c0_i32 : i32, i32
  }
  func.func @transform_6(%arg0: i32) -> (i32, i32) {
    %c0_i32 = arith.constant 0 : i32
    %c0_i32_0 = arith.constant 0 : i32
    %c0_i32_1 = arith.constant 0 : i32
    return %c0_i32, %c0_i32_0 : i32, i32
  }
  func.func @transform_7(%arg0: i32) -> (i32, i32) {
    %c0_i32 = arith.constant 0 : i32
    %c0_i32_0 = arith.constant 0 : i32
    return %arg0, %c0_i32 : i32, i32
  }
}

</mosaic_0001>

<llo_original>
// kernel: tpu_custom_call.1
$region0: #{tpu_custom_call.1}
  #allocation0 [shape = 'u32[]', space=smem, size = 0x4, offset = 0x4, fixed_abs, tag = 'smem constant byte address 0x4 - core index']
  #allocation1 [shape = 'u32[144,128]{1,0:T(1,128)}', space=vmem, size = 0x12000, scoped, tag = 'internal scratch']
  %s0 = inlined_call_operand.hbm [shape: f32[8,256], index: 0, kind: input, shape index: {}]
  %s1 = inlined_call_operand.vmem [shape: f32[32,256], index: 1, kind: input, shape index: {}]
  %s2 = inlined_call_operand.vmem [shape: bf16[32,8], index: 2, kind: input, shape index: {}]
  %s3 = inlined_call_operand.hbm [shape: bf16[32,32], index: 3, kind: input, shape index: {}]
  %s4 = inlined_call_operand.hbm [shape: bf16[2,16,16], index: 4, kind: input, shape index: {}]
  %s5 = inlined_call_operand.vmem [shape: f32[32,16], index: 5, kind: input, shape index: {}]
  %s6 = inlined_call_operand.vmem [shape: f32[4,256], index: 6, kind: input, shape index: {}]
  %s7 = inlined_call_operand.hbm [shape: f32[32,256], index: 7, kind: output, shape index: {}]
  %s8 = sld [smem:[#allocation0]]
  $region73: #{tpu_custom_call.1} parent=0
    _
  %s10 = ssub.s32 1, %s8
  %s11 = scalar_select 0, %s10, %s8
  $region1: #{tpu_custom_call.1} parent=0
    #allocation2 [shape = 'u8[8192]{0}', space=vmem, size = 0x2000, scoped, tag = 'input window, operand 0, single buffered']
    #allocation3 [shape = 's32[2]{0}', space=sflag, size = 0x8, scoped, tag = 'scoped memory for tpu_custom_call.1']
    #allocation4 [shape = 's32[2]{0}', space=sflag, size = 0x8, scoped, tag = 'scoped memory for tpu_custom_call.1']
    #allocation5 [shape = 'u8[8192]{0}', space=vmem, size = 0x2000, scoped, tag = 'input window, operand 3']
    #allocation6 [shape = 's32[2]{0}', space=sflag, size = 0x8, scoped, tag = 'scoped memory for tpu_custom_call.1']
    #allocation7 [shape = 'u8[8192]{0}', space=vmem, size = 0x2000, scoped, tag = 'input window, operand 4']
    #allocation8 [shape = 'u8[32768]{0}', space=vmem, size = 0x8000, scoped, tag = 'output window, operand 0']
    %12 = vsyncpa [#allocation3], 0
    %13 = vsyncpa [#allocation6], 0
    %s14 = scalar_lea.sflag [#allocation6], 1
    %15 = vsyncpa %s14, 0
    %16 = vsyncpa [#allocation4], 0
    %s17 = scalar_lea.sflag [#allocation4], 1
    %18 = vsyncpa %s17, 0
    loop: start=0, step=1, limit=4
    $region2: #{tpu_custom_call.1} parent=1 // loop_pre_header
      _
    $region3: #{tpu_custom_call.1} parent=1 // loop_header
      %s20 = sphi 0, %s24
      %p21 = scmp.ge.s32.totalorder %s20, 4
      %s28 = sphi 0, %s28
      %s30 = sphi 0, %s28
      %s31 = sphi 0, %s30
      %s45 = sphi 0, %s31
      %s49 = sphi 0, %s49
      %s51 = sphi 0, %s49
      %s52 = sphi 0, %s51
      %s66 = sphi 0, %s52
      %s72 = sphi 0, %s74
      %s75 = sphi 0, %s72
      %s76 = sphi 0, %s75
      %s92 = sphi 0, %s76
      %s98 = sphi 0, %s100
      %s101 = sphi 0, %s98
      %s102 = sphi 0, %s101
      %s118 = sphi 0, %s102
      %s124 = sphi 0, %s126
      %s127 = sphi 0, %s124
      %s128 = sphi 0, %s127
      %s144 = sphi 0, %s128
      %s150 = sphi 0, %s152
      %s153 = sphi 0, %s150
      %s154 = sphi 0, %s153
      %s170 = sphi 0, %s154
      %s174 = sphi 0, %s174
      %s176 = sphi 0, %s174
      %s177 = sphi 0, %s176
      %s191 = sphi 0, %s177
      %s197 = sphi 0, %s199
      %s200 = sphi 0, %s197
      %s201 = sphi 0, %s200
      %s217 = sphi 0, %s201
    $region4: #{tpu_custom_call.1} parent=1 // loop_header_branch
      %23 = sbr.rel (%p21) target = $region8
    $region5: #{tpu_custom_call.1} parent=1 // loop_body
      %s25 = ssub.s32 %s20, 1
      %s26 = ssub.s32 %s20, 2
      %s27 = sadd.s32 %s20, 1
      %s29 = sadd.s32 %s28, 1
      %p32 = scmp.eq.s32.totalorder %s20, 1
      %p33 = scmp.ne.s32.totalorder %s28, %s30
      %p34 = scmp.eq.s32.totalorder %s20, 0
      %p35 = por %p33, %p34
      %p36 = scmp.ne.s32.totalorder %s28, %s30
      %p37 = scmp.eq.s32.totalorder %s25, 1
      %p38 = por %p36, %p37
      %p39 = scmp.ne.s32.totalorder %s30, %s31
      %p40 = scmp.eq.s32.totalorder %s25, 0
      %p41 = por %p39, %p40
      %p42 = scmp.ne.s32.totalorder %s30, %s31
      %p43 = scmp.eq.s32.totalorder %s26, 1
      %p44 = por %p42, %p43
      %p46 = scmp.ne.s32.totalorder %s31, %s45
      %p47 = scmp.eq.s32.totalorder %s26, 0
      %p48 = por %p46, %p47
      %s50 = sadd.s32 %s49, 1
      %p53 = scmp.eq.s32.totalorder %s20, 1
      %p54 = scmp.ne.s32.totalorder %s49, %s51
      %p55 = scmp.eq.s32.totalorder %s20, 0
      %p56 = por %p54, %p55
      %p57 = scmp.ne.s32.totalorder %s49, %s51
      %p58 = scmp.eq.s32.totalorder %s25, 1
      %p59 = por %p57, %p58
      %p60 = scmp.ne.s32.totalorder %s51, %s52
      %p61 = scmp.eq.s32.totalorder %s25, 0
      %p62 = por %p60, %p61
      %p63 = scmp.ne.s32.totalorder %s51, %s52
      %p64 = scmp.eq.s32.totalorder %s26, 1
      %p65 = por %p63, %p64
      %p67 = scmp.ne.s32.totalorder %s52, %s66
      %p68 = scmp.eq.s32.totalorder %s26, 0
      %p69 = por %p67, %p68
      %s70 = ssub.s32 %s20, %s27
      %p71 = scmp.eq.s32.totalorder %s70, 0
      %s73 = sadd.s32 %s72, 1
      %s74 = scalar_select %p71, %s72, %s73
      %p77 = pneg %p71
      %p78 = scmp.eq.s32.totalorder %s20, 1
      %p79 = por %p77, %p78
      %p80 = scmp.ne.s32.totalorder %s72, %s75
      %p81 = scmp.eq.s32.totalorder %s20, 0
      %p82 = por %p80, %p81
      %p83 = scmp.ne.s32.totalorder %s72, %s75
      %p84 = scmp.eq.s32.totalorder %s25, 1
      %p85 = por %p83, %p84
      %p86 = scmp.ne.s32.totalorder %s75, %s76
      %p87 = scmp.eq.s32.totalorder %s25, 0
      %p88 = por %p86, %p87
      %p89 = scmp.ne.s32.totalorder %s75, %s76
      %p90 = scmp.eq.s32.totalorder %s26, 1
      %p91 = por %p89, %p90
      %p93 = scmp.ne.s32.totalorder %s76, %s92
      %p94 = scmp.eq.s32.totalorder %s26, 0
      %p95 = por %p93, %p94
      %s96 = ssub.s32 %s20, %s27
      %p97 = scmp.eq.s32.totalorder %s96, 0
      %s99 = sadd.s32 %s98, 1
      %s100 = scalar_select %p97, %s98, %s99
      %p103 = pneg %p97
      %p104 = scmp.eq.s32.totalorder %s20, 1
      %p105 = por %p103, %p104
      %p106 = scmp.ne.s32.totalorder %s98, %s101
      %p107 = scmp.eq.s32.totalorder %s20, 0
      %p108 = por %p106, %p107
      %p109 = scmp.ne.s32.totalorder %s98, %s101
      %p110 = scmp.eq.s32.totalorder %s25, 1
      %p111 = por %p109, %p110
      %p112 = scmp.ne.s32.totalorder %s101, %s102
      %p113 = scmp.eq.s32.totalorder %s25, 0
      %p114 = por %p112, %p113
      %p115 = scmp.ne.s32.totalorder %s101, %s102
      %p116 = scmp.eq.s32.totalorder %s26, 1
      %p117 = por %p115, %p116
      %p119 = scmp.ne.s32.totalorder %s102, %s118
      %p120 = scmp.eq.s32.totalorder %s26, 0
      %p121 = por %p119, %p120
      %s122 = ssub.s32 %s20, %s27
      %p123 = scmp.eq.s32.totalorder %s122, 0
      %s125 = sadd.s32 %s124, 1
      %s126 = scalar_select %p123, %s124, %s125
      %p129 = pneg %p123
      %p130 = scmp.eq.s32.totalorder %s20, 1
      %p131 = por %p129, %p130
      %p132 = scmp.ne.s32.totalorder %s124, %s127
      %p133 = scmp.eq.s32.totalorder %s20, 0
      %p134 = por %p132, %p133
      %p135 = scmp.ne.s32.totalorder %s124, %s127
      %p136 = scmp.eq.s32.totalorder %s25, 1
      %p137 = por %p135, %p136
      %p138 = scmp.ne.s32.totalorder %s127, %s128
      %p139 = scmp.eq.s32.totalorder %s25, 0
      %p140 = por %p138, %p139
      %p141 = scmp.ne.s32.totalorder %s127, %s128
      %p142 = scmp.eq.s32.totalorder %s26, 1
      %p143 = por %p141, %p142
      %p145 = scmp.ne.s32.totalorder %s128, %s144
      %p146 = scmp.eq.s32.totalorder %s26, 0
      %p147 = por %p145, %p146
      %s148 = ssub.s32 %s20, %s27
      %p149 = scmp.eq.s32.totalorder %s148, 0
      %s151 = sadd.s32 %s150, 1
      %s152 = scalar_select %p149, %s150, %s151
      %p155 = pneg %p149
      %p156 = scmp.eq.s32.totalorder %s20, 1
      %p157 = por %p155, %p156
      %p158 = scmp.ne.s32.totalorder %s150, %s153
      %p159 = scmp.eq.s32.totalorder %s20, 0
      %p160 = por %p158, %p159
      %p161 = scmp.ne.s32.totalorder %s150, %s153
      %p162 = scmp.eq.s32.totalorder %s25, 1
      %p163 = por %p161, %p162
      %p164 = scmp.ne.s32.totalorder %s153, %s154
      %p165 = scmp.eq.s32.totalorder %s25, 0
      %p166 = por %p164, %p165
      %p167 = scmp.ne.s32.totalorder %s153, %s154
      %p168 = scmp.eq.s32.totalorder %s26, 1
      %p169 = por %p167, %p168
      %p171 = scmp.ne.s32.totalorder %s154, %s170
      %p172 = scmp.eq.s32.totalorder %s26, 0
      %p173 = por %p171, %p172
      %s175 = sadd.s32 %s174, 1
      %p178 = scmp.eq.s32.totalorder %s20, 1
      %p179 = scmp.ne.s32.totalorder %s174, %s176
      %p180 = scmp.eq.s32.totalorder %s20, 0
      %p181 = por %p179, %p180
      %p182 = scmp.ne.s32.totalorder %s174, %s176
      %p183 = scmp.eq.s32.totalorder %s25, 1
      %p184 = por %p182, %p183
      %p185 = scmp.ne.s32.totalorder %s176, %s177
      %p186 = scmp.eq.s32.totalorder %s25, 0
      %p187 = por %p185, %p186
      %p188 = scmp.ne.s32.totalorder %s176, %s177
      %p189 = scmp.eq.s32.totalorder %s26, 1
      %p190 = por %p188, %p189
      %p192 = scmp.ne.s32.totalorder %s177, %s191
      %p193 = scmp.eq.s32.totalorder %s26, 0
      %p194 = por %p192, %p193
      %s195 = ssub.s32 %s20, %s27
      %p196 = scmp.eq.s32.totalorder %s195, 0
      %s198 = sadd.s32 %s197, 1
      %s199 = scalar_select %p196, %s197, %s198
      %p202 = pneg %p196
      %p203 = scmp.eq.s32.totalorder %s20, 1
      %p204 = por %p202, %p203
      %p205 = scmp.ne.s32.totalorder %s197, %s200
      %p206 = scmp.eq.s32.totalorder %s20, 0
      %p207 = por %p205, %p206
      %p208 = scmp.ne.s32.totalorder %s197, %s200
      %p209 = scmp.eq.s32.totalorder %s25, 1
      %p210 = por %p208, %p209
      %p211 = scmp.ne.s32.totalorder %s200, %s201
      %p212 = scmp.eq.s32.totalorder %s25, 0
      %p213 = por %p211, %p212
      %p214 = scmp.ne.s32.totalorder %s200, %s201
      %p215 = scmp.eq.s32.totalorder %s26, 1
      %p216 = por %p214, %p215
      %p218 = scmp.ne.s32.totalorder %s201, %s217
      %p219 = scmp.eq.s32.totalorder %s26, 0
      %p220 = por %p218, %p219
      %p221 = scmp.le.s32.totalorder 1, %s20
      %p222 = scmp.lt.s32.totalorder %s20, 3
      %p223 = pnand %p221, %p222
      %p224 = pneg %p223
      // Predicated region
      $region9: #{tpu_custom_call.1} parent=5 // pred_check
        _
      $region10: #{tpu_custom_call.1} parent=5 // pred_check_branch
        %226 = sbr.rel (%p223) target = $region12
      $region11: #{tpu_custom_call.1} parent=5 // pred_region
        %s227 = ssub.s32 %s20, 1
        // Predicated region
        $region13: #{tpu_custom_call.1} parent=11 // pred_check
          %p228 = pneg %p41
        $region14: #{tpu_custom_call.1} parent=11 // pred_check_branch
          %230 = sbr.rel (%p228) target = $region16
        $region15: #{tpu_custom_call.1} parent=11 // pred_region
          %s232 = ssub.s32 256, 256
          %233 = vsyncadd [#allocation3], %s232
          %s235 = sshll.u32 [#allocation2], 4
          %s236 = int_to_ptr.vmem [resolvable:$true] %s235
          %238 = dma.hbm_to_vmem [thread:$0]  %s0, 256, %s236, [#allocation3]
        $region16: #{tpu_custom_call.1} parent=11 // pred_fallthru
          _
        // Predicated region
        $region17: #{tpu_custom_call.1} parent=11 // pred_check
          %p239 = pneg %p62
        $region18: #{tpu_custom_call.1} parent=11 // pred_check_branch
          %241 = sbr.rel (%p239) target = $region20
        $region19: #{tpu_custom_call.1} parent=11 // pred_region
          _
        $region20: #{tpu_custom_call.1} parent=11 // pred_fallthru
          _
        // Predicated region
        $region21: #{tpu_custom_call.1} parent=11 // pred_check
          %p242 = pneg %p187
        $region22: #{tpu_custom_call.1} parent=11 // pred_check_branch
          %244 = sbr.rel (%p242) target = $region24
        $region23: #{tpu_custom_call.1} parent=11 // pred_region
          _
        $region24: #{tpu_custom_call.1} parent=11 // pred_fallthru
          _
      $region12: #{tpu_custom_call.1} parent=5 // pred_fallthru
        _
      %p245 = scmp.lt.s32.totalorder %s20, 2
      // Predicated region
      $region25: #{tpu_custom_call.1} parent=5 // pred_check
        %p246 = pneg %p245
      $region26: #{tpu_custom_call.1} parent=5 // pred_check_branch
        %248 = sbr.rel (%p246) target = $region28
      $region27: #{tpu_custom_call.1} parent=5 // pred_region
        // Predicated region
        $region29: #{tpu_custom_call.1} parent=27 // pred_check
          %p249 = pneg %p82
        $region30: #{tpu_custom_call.1} parent=27 // pred_check_branch
          %251 = sbr.rel (%p249) target = $region32
        $region31: #{tpu_custom_call.1} parent=27 // pred_region
          %s252 = smul.u32 2, %s20
          %p253 = scmp.lt.s32.totalorder %s252, 3
          %s254 = scalar_select %p253, %s252, 3
          %s255 = smul.addr %s254, 4
          %s256 = scalar_lea.vmem %s2, %s255
          %s257 = smul.u32 2, %s20
        $region32: #{tpu_custom_call.1} parent=27 // pred_fallthru
          _
        // Predicated region
        $region33: #{tpu_custom_call.1} parent=27 // pred_check
          %p258 = pneg %p108
        $region34: #{tpu_custom_call.1} parent=27 // pred_check_branch
          %260 = sbr.rel (%p258) target = $region36
        $region35: #{tpu_custom_call.1} parent=27 // pred_region
          %s261 = sand.u32 %s20, 1
          %s262 = scalar_lea.sflag [#allocation6], %s261
          %s263 = sand.u32 %s98, 1
          %s264 = smul.addr %s263, 8
          %s265 = scalar_lea.vmem [#allocation5], %s264
          %s266 = smul.u32 2, %s20
          %s268 = ssub.s32 128, 128
          %269 = vsyncadd %s262, %s268
          %s270 = smul.addr %s266, 64
          %s271 = scalar_lea.hbm %s3, %s270
          %s272 = sshll.u32 %s265, 4
          %s273 = int_to_ptr.vmem [resolvable:$true] %s272
          %278 = dma.hbm_to_vmem [thread:$0]  %s271, 128, %s273, %s262, 64, 64, 4
        $region36: #{tpu_custom_call.1} parent=27 // pred_fallthru
          _
        // Predicated region
        $region37: #{tpu_custom_call.1} parent=27 // pred_check
          %p279 = pneg %p134
        $region38: #{tpu_custom_call.1} parent=27 // pred_check_branch
          %281 = sbr.rel (%p279) target = $region40
        $region39: #{tpu_custom_call.1} parent=27 // pred_region
          %s282 = sand.u32 %s20, 1
          %s283 = scalar_lea.sflag [#allocation6], %s282
          %s284 = sand.u32 %s124, 1
          %s285 = smul.addr %s284, 8
          %s286 = scalar_lea.vmem [#allocation7], %s285
          %s288 = ssub.s32 128, 128
          %289 = vsyncadd %s283, %s288
          %s290 = smul.addr %s20, 2
          %s291 = smul.addr %s290, 64
          %s292 = scalar_lea.hbm %s4, %s291
          %s293 = sshll.u32 %s286, 4
          %s294 = int_to_ptr.vmem [resolvable:$true] %s293
          %299 = dma.hbm_to_vmem [thread:$0]  %s292, 128, %s294, %s283, 64, 64, 4
        $region40: #{tpu_custom_call.1} parent=27 // pred_fallthru
          _
        // Predicated region
        $region41: #{tpu_custom_call.1} parent=27 // pred_check
          %p300 = pneg %p160
        $region42: #{tpu_custom_call.1} parent=27 // pred_check_branch
          %302 = sbr.rel (%p300) target = $region44
        $region43: #{tpu_custom_call.1} parent=27 // pred_region
          %s303 = smul.u32 2, %s20
          %p304 = scmp.lt.s32.totalorder %s303, 3
          %s305 = scalar_select %p304, %s303, 3
          %s306 = smul.addr %s305, 8
          %s307 = scalar_lea.vmem %s5, %s306
          %s308 = smul.u32 2, %s20
        $region44: #{tpu_custom_call.1} parent=27 // pred_fallthru
          _
      $region28: #{tpu_custom_call.1} parent=5 // pred_fallthru
        _
      %p309 = scmp.le.s32.totalorder 1, %s20
      %p310 = scmp.lt.s32.totalorder %s20, 3
      %p311 = pnand %p309, %p310
      %p312 = pneg %p311
      // Predicated region
      $region45: #{tpu_custom_call.1} parent=5 // pred_check
        _
      $region46: #{tpu_custom_call.1} parent=5 // pred_check_branch
        %314 = sbr.rel (%p311) target = $region48
      $region47: #{tpu_custom_call.1} parent=5 // pred_region
        %s315 = ssub.s32 %s20, 1
        // Predicated region
        $region49: #{tpu_custom_call.1} parent=47 // pred_check
          %p316 = pneg %p41
        $region50: #{tpu_custom_call.1} parent=47 // pred_check_branch
          %318 = sbr.rel (%p316) target = $region52
        $region51: #{tpu_custom_call.1} parent=47 // pred_region
          %319 = dma.done [#allocation3], 256
        $region52: #{tpu_custom_call.1} parent=47 // pred_fallthru
          _
        %s320 = sand.u32 %s25, 1
        %s321 = scalar_lea.sflag [#allocation6], %s320
        %s322 = sand.u32 %s101, 1
        %s323 = smul.addr %s322, 8
        %s324 = scalar_lea.vmem [#allocation5], %s323
        // Predicated region
        $region53: #{tpu_custom_call.1} parent=47 // pred_check
          %p325 = pneg %p114
        $region54: #{tpu_custom_call.1} parent=47 // pred_check_branch
          %327 = sbr.rel (%p325) target = $region56
        $region55: #{tpu_custom_call.1} parent=47 // pred_region
          %328 = dma.done %s321, 128
        $region56: #{tpu_custom_call.1} parent=47 // pred_fallthru
          _
        %s329 = sand.u32 %s25, 1
        %s330 = scalar_lea.sflag [#allocation6], %s329
        %s331 = sand.u32 %s127, 1
        %s332 = smul.addr %s331, 8
        %s333 = scalar_lea.vmem [#allocation7], %s332
        // Predicated region
        $region57: #{tpu_custom_call.1} parent=47 // pred_check
          %p334 = pneg %p140
        $region58: #{tpu_custom_call.1} parent=47 // pred_check_branch
          %336 = sbr.rel (%p334) target = $region60
        $region59: #{tpu_custom_call.1} parent=47 // pred_region
          %337 = dma.done %s330, 128
        $region60: #{tpu_custom_call.1} parent=47 // pred_fallthru
          _
        %p338 = pneg %p41
        %p339 = pneg %p38
        %p340 = pneg %p62
        %p341 = pneg %p59
        %s342 = smul.u32 2, %s25
        %p343 = scmp.lt.s32.totalorder %s342, 3
        %s344 = scalar_select %p343, %s342, 3
        %s345 = smul.addr %s344, 4
        %s346 = scalar_lea.vmem %s2, %s345
        %p347 = pneg %p88
        %p348 = pneg %p85
        %s349 = sand.u32 %s25, 1
        %s350 = scalar_lea.sflag [#allocation6], %s349
        %s351 = sand.u32 %s101, 1
        %s352 = smul.addr %s351, 8
        %s353 = scalar_lea.vmem [#allocation5], %s352
        %p354 = pneg %p114
        %p355 = pneg %p111
        %s356 = sand.u32 %s25, 1
        %s357 = scalar_lea.sflag [#allocation6], %s356
        %s358 = sand.u32 %s127, 1
        %s359 = smul.addr %s358, 8
        %s360 = scalar_lea.vmem [#allocation7], %s359
        %p361 = pneg %p140
        %p362 = pneg %p137
        %s363 = smul.u32 2, %s25
        %p364 = scmp.lt.s32.totalorder %s363, 3
        %s365 = scalar_select %p364, %s363, 3
        %s366 = smul.addr %s365, 8
        %s367 = scalar_lea.vmem %s5, %s366
        %p368 = pneg %p166
        %p369 = pneg %p163
        %p370 = pneg %p187
        %p371 = pneg %p184
        %p372 = pneg %p213
        %p373 = pneg %p210
        %s374 = sand.u32 %s200, 1
        %s375 = scalar_lea.sflag [#allocation4], %s374
        %s376 = sand.u32 %s200, 1
        %s377 = smul.addr %s376, 32
        %s378 = scalar_lea.vmem [#allocation8], %s377
        %s379 = smul.u32 2, %s25
        %p380 = scmp.lt.s32.totalorder %s379, 3
        %s381 = scalar_select %p380, %s379, 3
        %s382 = smul.addr %s381, 4
        %s383 = scalar_lea.vmem %s2, %s382
        %s384 = smul.u32 2, %s25
        %s385 = smul.u32 2, %s25
        %s386 = smul.u32 2, %s25
        %p387 = scmp.lt.s32.totalorder %s386, 3
        %s388 = scalar_select %p387, %s386, 3
        %s389 = smul.addr %s388, 8
        %s390 = scalar_lea.vmem %s5, %s389
        %s391 = smul.u32 2, %s25
        %s392 = smul.u32 2, %s25
        %v394 = vld [vmem:[%s390] sm:$0xff]
        %v395 = vld [vmem:[%s390 + $0x8] sm:$0xff]
        %v396 = vld [vmem:[#allocation2] sm:$0xff]
        %v397 = vld [vmem:[#allocation2 + $0x8] sm:$0xff]
        %v398 = vpack.c.bf16 %v396, %v396
        %v399 = vpack.c.bf16 %v397, %v397
        %v400 = vld [vmem:[%s1] sm:$0xff]
        %v401 = vld [vmem:[%s1 + $0x8] sm:$0xff]
        %v402 = vld [vmem:[%s1 + $0x10] sm:$0xff]
        %v403 = vld [vmem:[%s1 + $0x18] sm:$0xff]
        %v404 = vld [vmem:[%s1 + $0x20] sm:$0xff]
        %v405 = vld [vmem:[%s1 + $0x28] sm:$0xff]
        %v406 = vld [vmem:[%s1 + $0x30] sm:$0xff]
        %v407 = vld [vmem:[%s1 + $0x38] sm:$0xff]
        %v408 = vpack.c.bf16 %v402, %v400
        %v409 = vpack.c.bf16 %v403, %v401
        %v410 = vpack.c.bf16 %v406, %v404
        %v411 = vpack.c.bf16 %v407, %v405
        %v412 = vld [vmem:[%s383] sm:$0xf]
        %v413 = vld [vmem:[%s383 + $0x4] sm:$0xf]
        %v414 = vld [vmem:[%s324] sm:$0xf]
        %v415 = vld [vmem:[%s324 + $0x4] sm:$0xf]
        %v418 = vunpack.c.l.b16 %v414
        %v419 = vunpack.c.l.b16 %v415
        %v420 = vpack.c.b16 %v419, %v418
        %vm421 = vcmask 261120
        %v423 = vsel %vm421, %v420, 0
        %425 = vmatprep.subr.bf16.mxu0 0
        %426 = vmatpush1.bf16.msra.mxu0 0
        %427 = vmatprep.subr.bf16.mxu0 0
        %428 = vmatpush1.bf16.msra.mxu0 0
        %429 = vmatprep.subr.bf16.mxu0 0
        %430 = vmatpush1.bf16.msra.mxu0 0
        %431 = vmatprep.subr.bf16.mxu0 0
        %432 = vmatpush1.bf16.msra.mxu0 0
        %433 = vmatprep.subr.bf16.mxu0 0
        %434 = vmatpush1.bf16.msra.mxu0 0
        %435 = vmatprep.subr.bf16.mxu0 0
        %436 = vmatpush1.bf16.msra.mxu0 0
        %437 = vmatprep.subr.bf16.mxu0 %v411
        %438 = vmatpush1.bf16.msra.mxu0 %v410
        %439 = vmatprep.subr.bf16.mxu0 %v409
        %440 = vmatpush1.bf16.msra.mxu0 %v408
        %441 = vmatprep.subr.bf16.mxu0 0
        %442 = vmatpush2.bf16.msra.mxu0 0
        %443 = vmatprep.subr.bf16.mxu0 0
        %444 = vmatpush2.bf16.msra.mxu0 0
        %445 = vmatprep.subr.bf16.mxu0 0
        %446 = vmatpush2.bf16.msra.mxu0 0
        %447 = vmatprep.subr.bf16.mxu0 0
        %448 = vmatpush2.bf16.msra.mxu0 0
        %449 = vmatprep.subr.bf16.mxu0 0
        %450 = vmatpush2.bf16.msra.mxu0 0
        %451 = vmatprep.subr.bf16.mxu0 0
        %452 = vmatpush2.bf16.msra.mxu0 0
        %453 = vmatprep.subr.bf16.mxu0 0
        %454 = vmatpush2.bf16.msra.mxu0 0
        %455 = vmatprep.subr.bf16.mxu0 0
        %456 = vmatpush2.bf16.msra.mxu0 0
        %457 = vmatprep.mubr.bf16.mxu0 0
        %458 = vmatmul.mubr.bf16.gmra.mxu0 %v423
        %v459 = vpop.f32.mrf.mxu0
        %v460 = vadd.f32 0.0, %v459
        %v461 = vpop.f32.mrf.mxu0
        %v462 = vadd.f32 0.0, %v461
        %v463 = vpop.f32.mrf.mxu0
        %v464 = vadd.f32 0.0, %v463
        %v465 = vpop.f32.mrf.mxu0
        %v466 = vadd.f32 0.0, %v465
        %467 = vdwg.mxu0
        %v470 = vunpack.c.l.b16 %v412
        %v471 = vunpack.c.l.b16 %v413
        %v472 = vpack.c.b16 %v471, %v470
        %vm473 = vcmask 64512
        %v475 = vsel %vm473, %v472, 0
        %vm477 = vcmask 1043456
        %v479 = vsel %vm477, %v398, 0
        %v482 = vsel %vm477, %v399, 0
        %484 = vmatprep.subr.bf16.mxu0 0
        %485 = vmatpush1.bf16.msra.mxu0 0
        %486 = vmatprep.subr.bf16.mxu0 0
        %487 = vmatpush1.bf16.msra.mxu0 0
        %488 = vmatprep.subr.bf16.mxu0 0
        %489 = vmatpush1.bf16.msra.mxu0 0
        %490 = vmatprep.subr.bf16.mxu0 0
        %491 = vmatpush1.bf16.msra.mxu0 0
        %492 = vmatprep.subr.bf16.mxu0 0
        %493 = vmatpush1.bf16.msra.mxu0 0
        %494 = vmatprep.subr.bf16.mxu0 0
        %495 = vmatpush1.bf16.msra.mxu0 0
        %496 = vmatprep.subr.bf16.mxu0 0
        %497 = vmatpush1.bf16.msra.mxu0 0
        %498 = vmatprep.subr.bf16.mxu0 %v482
        %499 = vmatpush1.bf16.msra.mxu0 %v479
        %500 = vmatprep.subr.bf16.mxu0 0
        %501 = vmatpush2.bf16.msra.mxu0 0
        %502 = vmatprep.subr.bf16.mxu0 0
        %503 = vmatpush2.bf16.msra.mxu0 0
        %504 = vmatprep.subr.bf16.mxu0 0
        %505 = vmatpush2.bf16.msra.mxu0 0
        %506 = vmatprep.subr.bf16.mxu0 0
        %507 = vmatpush2.bf16.msra.mxu0 0
        %508 = vmatprep.subr.bf16.mxu0 0
        %509 = vmatpush2.bf16.msra.mxu0 0
        %510 = vmatprep.subr.bf16.mxu0 0
        %511 = vmatpush2.bf16.msra.mxu0 0
        %512 = vmatprep.subr.bf16.mxu0 0
        %513 = vmatpush2.bf16.msra.mxu0 0
        %514 = vmatprep.subr.bf16.mxu0 0
        %515 = vmatpush2.bf16.msra.mxu0 0
        %516 = vmatprep.mubr.bf16.mxu0 0
        %517 = vmatmul.mubr.bf16.gmra.mxu0 %v475
        %v518 = vpop.f32.mrf.mxu0
        %v519 = vadd.f32 %v460, %v518
        %v520 = vpop.f32.mrf.mxu0
        %v521 = vadd.f32 %v462, %v520
        %v522 = vpop.f32.mrf.mxu0
        %v523 = vadd.f32 %v464, %v522
        %v524 = vpop.f32.mrf.mxu0
        %v525 = vadd.f32 %v466, %v524
        %526 = vdwg.mxu0
        %528 = vset.pattern.permute.xlu0 0
        %529 = vperm.xlu0 %528, %v394
        %v530 = vpop.permute.xlu0 %529
        %533 = vset.pattern.permute.xlu0 0
        %534 = vperm.xlu0 %533, %v395
        %v535 = vpop.permute.xlu0 %534
        %v537 = vadd.f32 %v519, %v530
        %v538 = vadd.f32 %v521, %v530
        %v539 = vadd.f32 %v523, %v535
        %v540 = vadd.f32 %v525, %v535
        %541 = vset.pattern.permute.xlu0 9
        %542 = vperm.xlu0 %541, %v394
        %v543 = vpop.permute.xlu0 %542
        %545 = vset.pattern.permute.xlu0 9
        %546 = vperm.xlu0 %545, %v395
        %v547 = vpop.permute.xlu0 %546
        %v549 = vmul.f32 %v543, %v537
        %v550 = vmul.f32 %v543, %v538
        %v551 = vmul.f32 %v547, %v539
        %v552 = vmul.f32 %v547, %v540
        %553 = vset.pattern.permute.xlu0 1
        %554 = vperm.xlu0 %553, %v394
        %v555 = vpop.permute.xlu0 %554
        %557 = vset.pattern.permute.xlu0 1
        %558 = vperm.xlu0 %557, %v395
        %v559 = vpop.permute.xlu0 %558
        %v561 = vadd.f32 %v549, %v555
        %v562 = vadd.f32 %v550, %v555
        %v563 = vadd.f32 %v551, %v559
        %v564 = vadd.f32 %v552, %v559
        %565 = vset.pattern.permute.xlu0 13
        %566 = vperm.xlu0 %565, %v394
        %v567 = vpop.permute.xlu0 %566
        %569 = vset.pattern.permute.xlu0 13
        %570 = vperm.xlu0 %569, %v395
        %v571 = vpop.permute.xlu0 %570
        %v573 = vmul.f32 %v567, %v537
        %v574 = vmul.f32 %v567, %v538
        %v575 = vmul.f32 %v571, %v539
        %v576 = vmul.f32 %v571, %v540
        %577 = vset.pattern.permute.xlu0 4
        %578 = vperm.xlu0 %577, %v394
        %v579 = vpop.permute.xlu0 %578
        %581 = vset.pattern.permute.xlu0 4
        %582 = vperm.xlu0 %581, %v395
        %v583 = vpop.permute.xlu0 %582
        %v585 = vadd.f32 %v573, %v579
        %v586 = vadd.f32 %v574, %v579
        %v587 = vadd.f32 %v575, %v583
        %v588 = vadd.f32 %v576, %v583
        %589 = vrot.lane.b32.xlu0 %v537, 2
        %v590 = vpop.permute.xlu0 %589
        %591 = vrot.lane.b32.xlu0 %v539, 2
        %v592 = vpop.permute.xlu0 %591
        %593 = vrot.lane.b32.xlu0 %v538, 2
        %v594 = vpop.permute.xlu0 %593
        %595 = vrot.lane.b32.xlu0 %v540, 2
        %v596 = vpop.permute.xlu0 %595
        %v597 = vlaneseq
        %v598 = vand.u32 %v597, 127
        %vm599 = vcmp.lt.s32.totalorder %v598, 2
        %v600 = vsel %vm599, %v590, %v594
        %v601 = vsel %vm599, %v592, %v596
        %v602 = vsel %vm599, %v594, %v590
        %v603 = vsel %vm599, %v596, %v592
        %v604 = vld [vmem:[%s6] ss:$4 sm:$0x3]
        %v606 = vlaneseq
        %v607 = vshrl.u32 %v606, 7
        %v608 = vsub.s32 0, %v607
        %v609 = vrot.slane %v604, %v608
        %v610 = vlaneseq
        %v611 = vshrl.u32 %v610, 7
        %v612 = vsub.s32 1, %v611
        %v613 = vrot.slane %v604, %v612
        %v616 = vmul.f32 %v602, %v609
        %v617 = vmul.f32 %v600, %v613
        %v618 = vmul.f32 %v603, %v609
        %v619 = vmul.f32 %v601, %v613
        %620 = vset.pattern.permute.xlu0 11
        %621 = vperm.xlu0 %620, %v394
        %v622 = vpop.permute.xlu0 %621
        %624 = vset.pattern.permute.xlu0 11
        %625 = vperm.xlu0 %624, %v395
        %v626 = vpop.permute.xlu0 %625
        %v628 = vmul.f32 %v622, %v616
        %v629 = vmul.f32 %v622, %v617
        %v630 = vmul.f32 %v626, %v618
        %v631 = vmul.f32 %v626, %v619
        %v632 = vadd.f32 %v585, %v628
        %v633 = vadd.f32 %v586, %v629
        %v634 = vadd.f32 %v587, %v630
        %v635 = vadd.f32 %v588, %v631
        %636 = vrot.lane.b32.xlu0 %v537, 1
        %v637 = vpop.permute.xlu0 %636
        %638 = vrot.lane.b32.xlu0 %v539, 1
        %v639 = vpop.permute.xlu0 %638
        %640 = vrot.lane.b32.xlu0 %v538, 1
        %v641 = vpop.permute.xlu0 %640
        %642 = vrot.lane.b32.xlu0 %v540, 1
        %v643 = vpop.permute.xlu0 %642
        %vm644 = vcmp.lt.s32.totalorder %v598, 1
        %v645 = vsel %vm644, %v637, %v641
        %v646 = vsel %vm644, %v639, %v643
        %v647 = vsel %vm644, %v641, %v637
        %v648 = vsel %vm644, %v643, %v639
        %s649 = scalar_lea.vmem %s6, 1
        %v650 = vld [vmem:[%s649] ss:$4 sm:$0x3]
        %v652 = vlaneseq
        %v653 = vshrl.u32 %v652, 7
        %v654 = vsub.s32 0, %v653
        %v655 = vrot.slane %v650, %v654
        %v656 = vlaneseq
        %v657 = vshrl.u32 %v656, 7
        %v658 = vsub.s32 1, %v657
        %v659 = vrot.slane %v650, %v658
        %v662 = vmul.f32 %v647, %v655
        %v663 = vmul.f32 %v645, %v659
        %v664 = vmul.f32 %v648, %v655
        %v665 = vmul.f32 %v646, %v659
        %666 = vset.pattern.permute.xlu0 8
        %667 = vperm.xlu0 %666, %v394
        %v668 = vpop.permute.xlu0 %667
        %670 = vset.pattern.permute.xlu0 8
        %671 = vperm.xlu0 %670, %v395
        %v672 = vpop.permute.xlu0 %671
        %v674 = vmul.f32 %v668, %v662
        %v675 = vmul.f32 %v668, %v663
        %v676 = vmul.f32 %v672, %v664
        %v677 = vmul.f32 %v672, %v665
        %v678 = vadd.f32 %v561, %v674
        %v679 = vadd.f32 %v562, %v675
        %v680 = vadd.f32 %v563, %v676
        %v681 = vadd.f32 %v564, %v677
        %682 = vset.pattern.permute.xlu0 12
        %683 = vperm.xlu0 %682, %v394
        %v684 = vpop.permute.xlu0 %683
        %686 = vset.pattern.permute.xlu0 12
        %687 = vperm.xlu0 %686, %v395
        %v688 = vpop.permute.xlu0 %687
        %v690 = vmul.f32 %v684, %v662
        %v691 = vmul.f32 %v684, %v663
        %v692 = vmul.f32 %v688, %v664
        %v693 = vmul.f32 %v688, %v665
        %v694 = vadd.f32 %v632, %v690
        %v695 = vadd.f32 %v633, %v691
        %v696 = vadd.f32 %v634, %v692
        %v697 = vadd.f32 %v635, %v693
        %698 = vrot.lane.b32.xlu0 %v537, 127
        %v699 = vpop.permute.xlu0 %698
        %700 = vrot.lane.b32.xlu0 %v539, 127
        %v701 = vpop.permute.xlu0 %700
        %702 = vrot.lane.b32.xlu0 %v538, 127
        %v703 = vpop.permute.xlu0 %702
        %704 = vrot.lane.b32.xlu0 %v540, 127
        %v705 = vpop.permute.xlu0 %704
        %vm706 = vcmp.lt.s32.totalorder %v598, 127
        %v707 = vsel %vm706, %v699, %v703
        %v708 = vsel %vm706, %v701, %v705
        %v709 = vsel %vm706, %v703, %v699
        %v710 = vsel %vm706, %v705, %v701
        %s711 = scalar_lea.vmem %s6, 2
        %v712 = vld [vmem:[%s711] ss:$4 sm:$0x3]
        %v714 = vlaneseq
        %v715 = vshrl.u32 %v714, 7
        %v716 = vsub.s32 0, %v715
        %v717 = vrot.slane %v712, %v716
        %v718 = vlaneseq
        %v719 = vshrl.u32 %v718, 7
        %v720 = vsub.s32 1, %v719
        %v721 = vrot.slane %v712, %v720
        %v724 = vmul.f32 %v707, %v717
        %v725 = vmul.f32 %v709, %v721
        %v726 = vmul.f32 %v708, %v717
        %v727 = vmul.f32 %v710, %v721
        %728 = vset.pattern.permute.xlu0 10
        %729 = vperm.xlu0 %728, %v394
        %v730 = vpop.permute.xlu0 %729
        %732 = vset.pattern.permute.xlu0 10
        %733 = vperm.xlu0 %732, %v395
        %v734 = vpop.permute.xlu0 %733
        %v736 = vmul.f32 %v730, %v724
        %v737 = vmul.f32 %v730, %v725
        %v738 = vmul.f32 %v734, %v726
        %v739 = vmul.f32 %v734, %v727
        %v740 = vadd.f32 %v678, %v736
        %v741 = vadd.f32 %v679, %v737
        %v742 = vadd.f32 %v680, %v738
        %v743 = vadd.f32 %v681, %v739
        %744 = vset.pattern.permute.xlu0 14
        %745 = vperm.xlu0 %744, %v394
        %v746 = vpop.permute.xlu0 %745
        %748 = vset.pattern.permute.xlu0 14
        %749 = vperm.xlu0 %748, %v395
        %v750 = vpop.permute.xlu0 %749
        %v752 = vmul.f32 %v746, %v724
        %v753 = vmul.f32 %v746, %v725
        %v754 = vmul.f32 %v750, %v726
        %v755 = vmul.f32 %v750, %v727
        %v756 = vadd.f32 %v694, %v752
        %v757 = vadd.f32 %v695, %v753
        %v758 = vadd.f32 %v696, %v754
        %v759 = vadd.f32 %v697, %v755
        %760 = vrot.lane.b32.xlu0 %v537, 126
        %v761 = vpop.permute.xlu0 %760
        %762 = vrot.lane.b32.xlu0 %v539, 126
        %v763 = vpop.permute.xlu0 %762
        %764 = vrot.lane.b32.xlu0 %v538, 126
        %v765 = vpop.permute.xlu0 %764
        %766 = vrot.lane.b32.xlu0 %v540, 126
        %v767 = vpop.permute.xlu0 %766
        %vm768 = vcmp.lt.s32.totalorder %v598, 126
        %v769 = vsel %vm768, %v761, %v765
        %v770 = vsel %vm768, %v763, %v767
        %v771 = vsel %vm768, %v765, %v761
        %v772 = vsel %vm768, %v767, %v763
        %s773 = scalar_lea.vmem %s6, 3
        %v774 = vld [vmem:[%s773] ss:$4 sm:$0x3]
        %v776 = vlaneseq
        %v777 = vshrl.u32 %v776, 7
        %v778 = vsub.s32 0, %v777
        %v779 = vrot.slane %v774, %v778
        %v780 = vlaneseq
        %v781 = vshrl.u32 %v780, 7
        %v782 = vsub.s32 1, %v781
        %v783 = vrot.slane %v774, %v782
        %v786 = vmul.f32 %v769, %v779
        %v787 = vmul.f32 %v771, %v783
        %v788 = vmul.f32 %v770, %v779
        %v789 = vmul.f32 %v772, %v783
        %790 = vset.pattern.permute.xlu0 15
        %791 = vperm.xlu0 %790, %v394
        %v792 = vpop.permute.xlu0 %791
        %794 = vset.pattern.permute.xlu0 15
        %795 = vperm.xlu0 %794, %v395
        %v796 = vpop.permute.xlu0 %795
        %v798 = vmul.f32 %v792, %v786
        %v799 = vmul.f32 %v792, %v787
        %v800 = vmul.f32 %v796, %v788
        %v801 = vmul.f32 %v796, %v789
        %v802 = vadd.f32 %v756, %v798
        %v803 = vadd.f32 %v757, %v799
        %v804 = vadd.f32 %v758, %v800
        %v805 = vadd.f32 %v759, %v801
        %v806 = vadd.f32 %v740, %v741
        %807 = vadd.xlane.f32.xlu0 %v806
        %v808 = vpop.xlane.xlu0 %807
        %v809 = vadd.f32 %v742, %v743
        %810 = vadd.xlane.f32.xlu0 %v809
        %v811 = vpop.xlane.xlu0 %810
        %v812 = vmul.f32 %v740, %v740
        %v813 = vmul.f32 %v741, %v741
        %v814 = vmul.f32 %v742, %v742
        %v815 = vmul.f32 %v743, %v743
        %v816 = vadd.f32 %v812, %v813
        %817 = vadd.xlane.f32.xlu0 %v816
        %v818 = vpop.xlane.xlu0 %817
        %v819 = vadd.f32 %v814, %v815
        %820 = vadd.xlane.f32.xlu0 %v819
        %v821 = vpop.xlane.xlu0 %820
        %v822 = vmul.f32 %v808, 0.00390625
        %v823 = vmul.f32 %v811, 0.00390625
        %v824 = vmul.f32 %v818, 0.00390625
        %v825 = vmul.f32 %v821, 0.00390625
        %v826 = vmul.f32 %v822, %v822
        %v827 = vmul.f32 %v823, %v823
        %v828 = vsub.f32 %v824, %v826
        %v829 = vsub.f32 %v825, %v827
        %v830 = vmax.f32 %v828, 0.0
        %v831 = vmax.f32 %v829, 0.0
        %v832 = vsub.f32 %v740, %v822
        %v833 = vsub.f32 %v741, %v822
        %v834 = vsub.f32 %v742, %v823
        %v835 = vsub.f32 %v743, %v823
        %836 = vset.pattern.permute.xlu0 2
        %837 = vperm.xlu0 %836, %v394
        %v838 = vpop.permute.xlu0 %837
        %840 = vset.pattern.permute.xlu0 2
        %841 = vperm.xlu0 %840, %v395
        %v842 = vpop.permute.xlu0 %841
        %v844 = vmul.f32 %v838, %v832
        %v845 = vmul.f32 %v838, %v833
        %v846 = vmul.f32 %v842, %v834
        %v847 = vmul.f32 %v842, %v835
        %v848 = vadd.f32 %v830, 1e-05
        %v849 = vadd.f32 %v831, 1e-05
        %v850 = vrsqrt.pop %v848
        %v851 = vrsqrt.pop %v849
        %v852 = vmul.f32 %v844, %v850
        %v853 = vmul.f32 %v845, %v850
        %v854 = vmul.f32 %v846, %v851
        %v855 = vmul.f32 %v847, %v851
        %856 = vset.pattern.permute.xlu0 3
        %857 = vperm.xlu0 %856, %v394
        %v858 = vpop.permute.xlu0 %857
        %860 = vset.pattern.permute.xlu0 3
        %861 = vperm.xlu0 %860, %v395
        %v862 = vpop.permute.xlu0 %861
        %v864 = vadd.f32 %v852, %v858
        %v865 = vadd.f32 %v853, %v858
        %v866 = vadd.f32 %v854, %v862
        %v867 = vadd.f32 %v855, %v862
        %v868 = vsub.f32 0.0, %v864
        %v869 = vsub.f32 0.0, %v865
        %v870 = vsub.f32 0.0, %v866
        %v871 = vsub.f32 0.0, %v867
        %v872 = vmul.f32 %v868, 1.442695
        %v873 = vpow.pop %v872
        %v874 = vmul.f32 %v869, 1.442695
        %v875 = vpow.pop %v874
        %v876 = vmul.f32 %v870, 1.442695
        %v877 = vpow.pop %v876
        %v878 = vmul.f32 %v871, 1.442695
        %v879 = vpow.pop %v878
        %v880 = vadd.f32 %v873, 1.0
        %v881 = vadd.f32 %v875, 1.0
        %v882 = vadd.f32 %v877, 1.0
        %v883 = vadd.f32 %v879, 1.0
        %v884 = vrcp.pop %v880
        %v885 = vrcp.pop %v881
        %v886 = vrcp.pop %v882
        %v887 = vrcp.pop %v883
        %v888 = vadd.f32 %v802, %v803
        %889 = vadd.xlane.f32.xlu0 %v888
        %v890 = vpop.xlane.xlu0 %889
        %v891 = vadd.f32 %v804, %v805
        %892 = vadd.xlane.f32.xlu0 %v891
        %v893 = vpop.xlane.xlu0 %892
        %v894 = vmul.f32 %v802, %v802
        %v895 = vmul.f32 %v803, %v803
        %v896 = vmul.f32 %v804, %v804
        %v897 = vmul.f32 %v805, %v805
        %v898 = vadd.f32 %v894, %v895
        %899 = vadd.xlane.f32.xlu0 %v898
        %v900 = vpop.xlane.xlu0 %899
        %v901 = vadd.f32 %v896, %v897
        %902 = vadd.xlane.f32.xlu0 %v901
        %v903 = vpop.xlane.xlu0 %902
        %v904 = vmul.f32 %v890, 0.00390625
        %v905 = vmul.f32 %v893, 0.00390625
        %v906 = vmul.f32 %v900, 0.00390625
        %v907 = vmul.f32 %v903, 0.00390625
        %v908 = vmul.f32 %v904, %v904
        %v909 = vmul.f32 %v905, %v905
        %v910 = vsub.f32 %v906, %v908
        %v911 = vsub.f32 %v907, %v909
        %v912 = vmax.f32 %v910, 0.0
        %v913 = vmax.f32 %v911, 0.0
        %v914 = vsub.f32 %v802, %v904
        %v915 = vsub.f32 %v803, %v904
        %v916 = vsub.f32 %v804, %v905
        %v917 = vsub.f32 %v805, %v905
        %918 = vset.pattern.permute.xlu0 5
        %919 = vperm.xlu0 %918, %v394
        %v920 = vpop.permute.xlu0 %919
        %922 = vset.pattern.permute.xlu0 5
        %923 = vperm.xlu0 %922, %v395
        %v924 = vpop.permute.xlu0 %923
        %v926 = vmul.f32 %v920, %v914
        %v927 = vmul.f32 %v920, %v915
        %v928 = vmul.f32 %v924, %v916
        %v929 = vmul.f32 %v924, %v917
        %v930 = vadd.f32 %v912, 1e-05
        %v931 = vadd.f32 %v913, 1e-05
        %v932 = vrsqrt.pop %v930
        %v933 = vrsqrt.pop %v931
        %v934 = vmul.f32 %v926, %v932
        %v935 = vmul.f32 %v927, %v932
        %v936 = vmul.f32 %v928, %v933
        %v937 = vmul.f32 %v929, %v933
        %938 = vset.pattern.permute.xlu0 6
        %939 = vperm.xlu0 %938, %v394
        %v940 = vpop.permute.xlu0 %939
        %942 = vset.pattern.permute.xlu0 6
        %943 = vperm.xlu0 %942, %v395
        %v944 = vpop.permute.xlu0 %943
        %v946 = vadd.f32 %v934, %v940
        %v947 = vadd.f32 %v935, %v940
        %v948 = vadd.f32 %v936, %v944
        %v949 = vadd.f32 %v937, %v944
        %v950 = vld [vmem:[%s333] sm:$0xf]
        %v951 = vld [vmem:[%s333 + $0x4] sm:$0xf]
        %v952 = vmul.f32 %v537, %v946
        %v953 = vmul.f32 %v538, %v947
        %v954 = vmul.f32 %v539, %v948
        %v955 = vmul.f32 %v540, %v949
        %v956 = vpack.c.bf16 %v954, %v952
        %v957 = vpack.c.bf16 %v955, %v953
        %958 = vset.pattern.permute.xlu0 7
        %959 = vperm.xlu0 %958, %v394
        %v960 = vpop.permute.xlu0 %959
        %962 = vset.pattern.permute.xlu0 7
        %963 = vperm.xlu0 %962, %v395
        %v964 = vpop.permute.xlu0 %963
        %v968 = vunpack.c.l.b16 %v950
        %v969 = vunpack.c.l.b16 %v951
        %v970 = vpack.c.b16 %v969, %v968
        %vm971 = vcmask 130048
        %v973 = vsel %vm971, %v970, 0
        %975 = vmatprep.subr.bf16.mxu0 0
        %976 = vmatpush1.bf16.msra.mxu0 0
        %977 = vmatprep.subr.bf16.mxu0 0
        %978 = vmatpush1.bf16.msra.mxu0 0
        %979 = vmatprep.subr.bf16.mxu0 0
        %980 = vmatpush1.bf16.msra.mxu0 0
        %981 = vmatprep.subr.bf16.mxu0 0
        %982 = vmatpush1.bf16.msra.mxu0 0
        %983 = vmatprep.subr.bf16.mxu0 0
        %984 = vmatpush1.bf16.msra.mxu0 0
        %985 = vmatprep.subr.bf16.mxu0 0
        %986 = vmatpush1.bf16.msra.mxu0 0
        %987 = vmatprep.subr.bf16.mxu0 0
        %988 = vmatpush1.bf16.msra.mxu0 0
        %989 = vmatprep.subr.bf16.mxu0 %v957
        %990 = vmatpush1.bf16.msra.mxu0 %v956
        %991 = vmatprep.subr.bf16.mxu0 0
        %992 = vmatpush2.bf16.msra.mxu0 0
        %993 = vmatprep.subr.bf16.mxu0 0
        %994 = vmatpush2.bf16.msra.mxu0 0
        %995 = vmatprep.subr.bf16.mxu0 0
        %996 = vmatpush2.bf16.msra.mxu0 0
        %997 = vmatprep.subr.bf16.mxu0 0
        %998 = vmatpush2.bf16.msra.mxu0 0
        %999 = vmatprep.subr.bf16.mxu0 0
        %1000 = vmatpush2.bf16.msra.mxu0 0
        %1001 = vmatprep.subr.bf16.mxu0 0
        %1002 = vmatpush2.bf16.msra.mxu0 0
        %1003 = vmatprep.subr.bf16.mxu0 0
        %1004 = vmatpush2.bf16.msra.mxu0 0
        %1005 = vmatprep.subr.bf16.mxu0 0
        %1006 = vmatpush2.bf16.msra.mxu0 0
        %1007 = vmatprep.mubr.bf16.mxu0 0
        %1008 = vmatmul.mubr.bf16.gmra.mxu0 %v973
        %v1009 = vpop.f32.mrf.mxu0
        %v1010 = vadd.f32 %v960, %v1009
        %v1011 = vpop.f32.mrf.mxu0
        %v1012 = vadd.f32 %v960, %v1011
        %v1013 = vpop.f32.mrf.mxu0
        %v1014 = vadd.f32 %v964, %v1013
        %v1015 = vpop.f32.mrf.mxu0
        %v1016 = vadd.f32 %v964, %v1015
        %1017 = vdwg.mxu0
        %v1018 = vmul.f32 %v884, %v537
        %v1019 = vmul.f32 %v885, %v538
        %v1020 = vmul.f32 %v886, %v539
        %v1021 = vmul.f32 %v887, %v540
        %v1022 = vsub.f32 1.0, %v884
        %v1023 = vsub.f32 1.0, %v885
        %v1024 = vsub.f32 1.0, %v886
        %v1025 = vsub.f32 1.0, %v887
        %v1026 = vtanh.pop %v1010
        %v1027 = vtanh.pop %v1012
        %v1028 = vtanh.pop %v1014
        %v1029 = vtanh.pop %v1016
        %v1030 = vmul.f32 %v1022, %v1026
        %v1031 = vmul.f32 %v1023, %v1027
        %v1032 = vmul.f32 %v1024, %v1028
        %v1033 = vmul.f32 %v1025, %v1029
        %v1034 = vadd.f32 %v1018, %v1030
        %v1035 = vadd.f32 %v1019, %v1031
        %v1036 = vadd.f32 %v1020, %v1032
        %v1037 = vadd.f32 %v1021, %v1033
        %1038 = vst [vmem:[%s378] sm:$0xff] %v1034
        %1039 = vst [vmem:[%s378 + $0x8] sm:$0xff] %v1035
        %1040 = vst [vmem:[%s378 + $0x10] sm:$0xff] %v1036
        %1041 = vst [vmem:[%s378 + $0x18] sm:$0xff] %v1037
        %s1042 = sand.u32 %s200, 1
        %s1043 = scalar_lea.sflag [#allocation4], %s1042
        %s1044 = sand.u32 %s200, 1
        %s1045 = smul.addr %s1044, 32
        %s1046 = scalar_lea.vmem [#allocation8], %s1045
        // Predicated region
        $region61: #{tpu_custom_call.1} parent=47 // pred_check
          %p1047 = pneg %p210
        $region62: #{tpu_custom_call.1} parent=47 // pred_check_branch
          %1049 = sbr.rel (%p1047) target = $region64
        $region63: #{tpu_custom_call.1} parent=47 // pred_region
          %s1050 = smul.u32 2, %s25
          %s1052 = ssub.s32 512, 512
          %1053 = vsyncadd %s1043, %s1052
          %s1054 = smul.addr %s1050, 2
          %s1055 = smul.addr %s1054, 128
          %s1056 = scalar_lea.hbm %s7, %s1055
          %s1057 = sshll.u32 %s1046, 4
          %s1058 = int_to_ptr.vmem [resolvable:$true] %s1057
          %1063 = dma.vmem_to_hbm [thread:$0]  %s1058, 512, %s1056, %s1043, 256, 256, 16
        $region64: #{tpu_custom_call.1} parent=47 // pred_fallthru
          _
      $region48: #{tpu_custom_call.1} parent=5 // pred_fallthru
        _
      %p1064 = scmp.le.s32.totalorder 2, %s20
      // Predicated region
      $region65: #{tpu_custom_call.1} parent=5 // pred_check
        %p1065 = pneg %p1064
      $region66: #{tpu_custom_call.1} parent=5 // pred_check_branch
        %1067 = sbr.rel (%p1065) target = $region68
      $region67: #{tpu_custom_call.1} parent=5 // pred_region
        %s1068 = ssub.s32 %s20, 2
        // Predicated region
        $region69: #{tpu_custom_call.1} parent=67 // pred_check
          %p1069 = pneg %p216
        $region70: #{tpu_custom_call.1} parent=67 // pred_check_branch
          %1071 = sbr.rel (%p1069) target = $region72
        $region71: #{tpu_custom_call.1} parent=67 // pred_region
          %s1072 = sand.u32 %s201, 1
          %s1073 = scalar_lea.sflag [#allocation4], %s1072
          %s1074 = sand.u32 %s201, 1
          %s1075 = smul.addr %s1074, 32
          %s1076 = scalar_lea.vmem [#allocation8], %s1075
          %1077 = dma.done %s1073, 512
        $region72: #{tpu_custom_call.1} parent=67 // pred_fallthru
          _
      $region68: #{tpu_custom_call.1} parent=5 // pred_fallthru
        _
    $region6: #{tpu_custom_call.1} parent=1 // loop_footer
      %s24 = sadd.s32 1, %s20
    $region7: #{tpu_custom_call.1} parent=1 // loop_footer_branch
      %19 = sbr.rel target = $region3
    $region8: #{tpu_custom_call.1} parent=1 // loop_exit
      _
    %1078 = vsyncpa [#allocation3], 1
    %s1079 = scalar_lea.sflag [#allocation3], 1
    %1080 = vsyncpa %s1079, 1
    %1081 = vsyncpa [#allocation6], 1
    %s1082 = scalar_lea.sflag [#allocation6], 1
    %1083 = vsyncpa %s1082, 1
    %1084 = vsyncpa [#allocation4], 1
    %s1085 = scalar_lea.sflag [#allocation4], 1
    %1086 = vsyncpa %s1085, 1

</llo_original>
